<compile_context>
chip_gen: v7x
topology: tpu7x:2x2x1
jax: 0.10.0
libtpu: 0.0.40
codegen_flags: <defaults>
</compile_context>

<pallas_src>
import functools

import jax
import jax.numpy as jnp
from jax.experimental import pallas as pl
from jax.experimental.pallas import tpu as pltpu

_SUBLANE = 8          # f32 sublane granularity
_MAX_BLOCK_B = 8192   # rows per tile cap (keeps double-buffered VMEM use ~a few MiB)


def _round_up(n, m):
    return ((n + m - 1) // m) * m


def _default_num_tiles():
    """One batch tile per TensorCore: 1 on v5e/v6e, 2 on chips exposing 2 TCs."""
    try:
        dev = jax.devices()[0]
        for attr in ("num_cores", "core_count"):
            n = getattr(dev, attr, None)
            if n:
                return max(1, int(n))
    except Exception:
        pass
    return 1


def _policy_kernel(x_ref, w1_ref, b1_ref, w2_ref, b2_ref, out_ref):
    # Two MXU matmuls (f32, f32 accumulate) + VPU relu + EUP exp + XLU row reductions.
    x = x_ref[...]                                                      # (Bt, d_in)
    h = jnp.dot(x, w1_ref[...], preferred_element_type=jnp.float32) + b1_ref[...]
    h = jnp.maximum(h, 0.0)                                             # ReLU, (Bt, d_h)
    logits = jnp.dot(h, w2_ref[...],
                     preferred_element_type=jnp.float32) + b2_ref[...]  # (Bt, d_out)
    # Numerically stable, exact softmax over the (narrow) lane axis.
    m = jnp.max(logits, axis=-1, keepdims=True)
    e = jnp.exp(logits - m)
    denom = jnp.sum(e, axis=-1, keepdims=True)
    out_ref[...] = (e / denom).astype(out_ref.dtype)


@functools.partial(jax.jit, static_argnames=("num_tiles",))
def _policy_forward_jit(x, w1, b1, w2, b2, *, num_tiles):
    B, d_in = x.shape
    d_h = w1.shape[1]
    d_out = w2.shape[1]

    # Pad batch only to the sublane granularity times the tile count.
    Bp = _round_up(B, _SUBLANE * num_tiles)
    block_b = Bp // num_tiles
    xp = x if Bp == B else jnp.pad(x, ((0, Bp - B), (0, 0)))

    out = pl.pallas_call(
        _policy_kernel,
        out_shape=jax.ShapeDtypeStruct((Bp, d_out), jnp.float32),
        grid=(num_tiles,),
        in_specs=[
            pl.BlockSpec((block_b, d_in), lambda i: (i, 0)),  # streamed per batch tile
            pl.BlockSpec((d_in, d_h), lambda i: (0, 0)),      # weights: VMEM-resident
            pl.BlockSpec((1, d_h), lambda i: (0, 0)),
            pl.BlockSpec((d_h, d_out), lambda i: (0, 0)),
            pl.BlockSpec((1, d_out), lambda i: (0, 0)),
        ],
        # Narrow output: last block dim == full array dim (d_out), so this is legal;
        # the masked vst on a few KB of payload is noise vs. the 16x padded writeback.
        out_specs=pl.BlockSpec((block_b, d_out), lambda i: (i, 0)),
        compiler_params=pltpu.CompilerParams(
            dimension_semantics=("parallel",)),  # shards the (<=2) tiles across TCs
    )(xp, w1, b1, w2, b2)

    return out if Bp == B else out[:B]


def policy_network_forward(x, w1, b1, w2, b2, *, num_tiles=None):
    """x: (B, input_dim) f32. w1: (D_in, 64), b1: (1, 64), w2: (64, D_out),
    b2: (1, D_out), all f32. Returns exact softmax probs (B, D_out) f32."""
    B = x.shape[0]
    if num_tiles is None:
        num_tiles = _default_num_tiles()
    # Never make tiles smaller than one sublane group of rows.
    num_tiles = max(1, min(int(num_tiles), max(1, _round_up(B, _SUBLANE) // _SUBLANE)))
    # VMEM safety cap: grow the tile count if a single tile would exceed _MAX_BLOCK_B rows.
    num_tiles = max(num_tiles, pl.cdiv(_round_up(B, _SUBLANE), _MAX_BLOCK_B))
    return _policy_forward_jit(x, w1, b1, w2, b2, num_tiles=num_tiles)


def init_params(key, input_dim, hidden_dim, output_dim):
    """Deterministic init mimicking nn.Linear's uniform(-1/sqrt(fan_in), 1/sqrt(fan_in))."""
    k1, k2, k3, k4 = jax.random.split(key, 4)
    lim1 = 1.0 / jnp.sqrt(jnp.float32(input_dim))
    lim2 = 1.0 / jnp.sqrt(jnp.float32(hidden_dim))
    w1 = jax.random.uniform(k1, (input_dim, hidden_dim), jnp.float32, -lim1, lim1)
    b1 = jax.random.uniform(k2, (1, hidden_dim), jnp.float32, -lim1, lim1)
    w2 = jax.random.uniform(k3, (hidden_dim, output_dim), jnp.float32, -lim2, lim2)
    b2 = jax.random.uniform(k4, (1, output_dim), jnp.float32, -lim2, lim2)
    return w1, b1, w2, b2


if __name__ == "__main__":
    # Module shapes: Linear(input_dim, 64) -> ReLU -> Linear(64, output_dim) -> Softmax.
    input_dim, hidden_dim, output_dim = 32, 64, 8
    batch = 16  # small example batch; splits into 2 parallel tiles on 2-TC chips

    key = jax.random.PRNGKey(0)
    kx, kp = jax.random.split(key)
    x = jax.random.normal(kx, (batch, input_dim), jnp.float32)
    w1, b1, w2, b2 = init_params(kp, input_dim, hidden_dim, output_dim)

    probs = policy_network_forward(x, w1, b1, w2, b2)
    probs = jax.block_until_ready(probs)

    # Reference in plain JAX, f32 throughout.
    h_ref = jnp.maximum(jnp.dot(x, w1, preferred_element_type=jnp.float32) + b1, 0.0)
    logits_ref = jnp.dot(h_ref, w2, preferred_element_type=jnp.float32) + b2
    ref = jax.nn.softmax(logits_ref, axis=-1)

    assert probs.shape == (batch, output_dim)
    # Small tolerance covers any MXU-vs-XLA f32 matmul precision differences.
    assert jnp.allclose(probs, ref, atol=2e-3, rtol=2e-3), "mismatch vs reference"
    assert jnp.allclose(jnp.sum(probs, axis=-1), 1.0, atol=1e-4)
    assert bool(jnp.all(probs >= 0.0))

    print("KERNEL_OK")
</pallas_src>

<mosaic_0001>
module attributes {stable_mosaic.version = 11 : i64} {
  func.func @_policy_kernel(%arg0: i32, %arg1: memref<16x32xf32, #tpu.memory_space<vmem>>, %arg2: memref<32x64xf32, #tpu.memory_space<vmem>>, %arg3: memref<1x64xf32, #tpu.memory_space<vmem>>, %arg4: memref<64x8xf32, #tpu.memory_space<vmem>>, %arg5: memref<1x8xf32, #tpu.memory_space<vmem>>, %arg6: memref<16x8xf32, #tpu.memory_space<vmem>>) attributes {dimension_semantics = [#tpu.dimension_semantics<parallel>], iteration_bounds = array<i64: 1>, scalar_prefetch = 0 : i64, scratch_operands = 0 : i64, tpu.core_type = #tpu.core_type<tc>, window_params = [{transform_indices = @transform_0, window_bounds = array<i64: 16, 32>}, {pipeline_mode = #tpu.pipeline_mode<synchronous>, transform_indices = @transform_1, window_bounds = array<i64: 32, 64>}, {pipeline_mode = #tpu.pipeline_mode<synchronous>, transform_indices = @transform_2, window_bounds = array<i64: 1, 64>}, {pipeline_mode = #tpu.pipeline_mode<synchronous>, transform_indices = @transform_3, window_bounds = array<i64: 64, 8>}, {pipeline_mode = #tpu.pipeline_mode<synchronous>, transform_indices = @transform_4, window_bounds = array<i64: 1, 8>}, {transform_indices = @transform_5, window_bounds = array<i64: 16, 8>}]} {
    %c0 = arith.constant 0 : index
    %c0_0 = arith.constant 0 : index
    %0 = vector.load %arg1[%c0, %c0_0] : memref<16x32xf32, #tpu.memory_space<vmem>>, vector<16x32xf32>
    %c0_1 = arith.constant 0 : index
    %c0_2 = arith.constant 0 : index
    %1 = vector.load %arg2[%c0_1, %c0_2] : memref<32x64xf32, #tpu.memory_space<vmem>>, vector<32x64xf32>
    %cst = arith.constant dense<0.000000e+00> : vector<16x64xf32>
    %2 = tpu.matmul %0, %1, %cst {dimension_numbers = #tpu.dot_dimension_numbers<[1], [0], [0], [1], [0, 0, 1, 1], [], []>} : vector<16x32xf32>, vector<32x64xf32>, vector<16x64xf32> -> vector<16x64xf32>
    %c0_3 = arith.constant 0 : index
    %c0_4 = arith.constant 0 : index
    %3 = vector.load %arg3[%c0_3, %c0_4] : memref<1x64xf32, #tpu.memory_space<vmem>>, vector<1x64xf32>
    %4 = vector.broadcast %3 : vector<1x64xf32> to vector<16x64xf32>
    %5 = arith.addf %2, %4 : vector<16x64xf32>
    %cst_5 = arith.constant 0.000000e+00 : f32
    %6 = vector.broadcast %cst_5 : f32 to vector<16x64xf32>
    %7 = arith.maximumf %5, %6 : vector<16x64xf32>
    %c0_6 = arith.constant 0 : index
    %c0_7 = arith.constant 0 : index
    %8 = vector.load %arg4[%c0_6, %c0_7] : memref<64x8xf32, #tpu.memory_space<vmem>>, vector<64x8xf32>
    %cst_8 = arith.constant dense<0.000000e+00> : vector<16x8xf32>
    %9 = tpu.matmul %7, %8, %cst_8 {dimension_numbers = #tpu.dot_dimension_numbers<[1], [0], [0], [1], [0, 0, 1, 1], [], []>} : vector<16x64xf32>, vector<64x8xf32>, vector<16x8xf32> -> vector<16x8xf32>
    %c0_9 = arith.constant 0 : index
    %c0_10 = arith.constant 0 : index
    %10 = vector.load %arg5[%c0_9, %c0_10] : memref<1x8xf32, #tpu.memory_space<vmem>>, vector<1x8xf32>
    %11 = vector.broadcast %10 : vector<1x8xf32> to vector<16x8xf32>
    %12 = arith.addf %9, %11 : vector<16x8xf32>
    %cst_11 = arith.constant dense<0xFF800000> : vector<16xf32>
    %13 = vector.multi_reduction <maximumf>, %12, %cst_11 [1] : vector<16x8xf32> to vector<16xf32>
    %14 = vector.shape_cast %13 : vector<16xf32> to vector<16x1xf32>
    %15 = vector.broadcast %14 : vector<16x1xf32> to vector<16x8xf32>
    %16 = arith.subf %12, %15 : vector<16x8xf32>
    %17 = math.exp %16 : vector<16x8xf32>
    %cst_12 = arith.constant dense<0.000000e+00> : vector<16xf32>
    %18 = vector.multi_reduction <add>, %17, %cst_12 [1] : vector<16x8xf32> to vector<16xf32>
    %19 = vector.shape_cast %18 : vector<16xf32> to vector<16x1xf32>
    %20 = vector.broadcast %19 : vector<16x1xf32> to vector<16x8xf32>
    %21 = arith.divf %17, %20 : vector<16x8xf32>
    %c0_13 = arith.constant 0 : index
    %c0_14 = arith.constant 0 : index
    %22 = vector.load %arg6[%c0_13, %c0_14] : memref<16x8xf32, #tpu.memory_space<vmem>>, vector<16x8xf32>
    tpu.vector_store %arg6[%c0_13, %c0_14], %21 {strides = array<i32>} : memref<16x8xf32, #tpu.memory_space<vmem>>, vector<16x8xf32>,
    return
  }
  func.func @transform_0(%arg0: i32) -> (i32, i32) {
    %c0_i32 = arith.constant 0 : i32
    %c0_i32_0 = arith.constant 0 : i32
    return %arg0, %c0_i32 : i32, i32
  }
  func.func @transform_1(%arg0: i32) -> (i32, i32) {
    %c0_i32 = arith.constant 0 : i32
    %c0_i32_0 = arith.constant 0 : i32
    %c0_i32_1 = arith.constant 0 : i32
    return %c0_i32, %c0_i32_0 : i32, i32
  }
  func.func @transform_2(%arg0: i32) -> (i32, i32) {
    %c0_i32 = arith.constant 0 : i32
    %c0_i32_0 = arith.constant 0 : i32
    %c0_i32_1 = arith.constant 0 : i32
    return %c0_i32, %c0_i32_0 : i32, i32
  }
  func.func @transform_3(%arg0: i32) -> (i32, i32) {
    %c0_i32 = arith.constant 0 : i32
    %c0_i32_0 = arith.constant 0 : i32
    %c0_i32_1 = arith.constant 0 : i32
    return %c0_i32, %c0_i32_0 : i32, i32
  }
  func.func @transform_4(%arg0: i32) -> (i32, i32) {
    %c0_i32 = arith.constant 0 : i32
    %c0_i32_0 = arith.constant 0 : i32
    %c0_i32_1 = arith.constant 0 : i32
    return %c0_i32, %c0_i32_0 : i32, i32
  }
  func.func @transform_5(%arg0: i32) -> (i32, i32) {
    %c0_i32 = arith.constant 0 : i32
    %c0_i32_0 = arith.constant 0 : i32
    return %arg0, %c0_i32 : i32, i32
  }
}

</mosaic_0001>

<llo_original>
// kernel: _policy_forward_jit.1
$region0: #{_policy_forward_jit.1}
  #allocation0 [shape = 'u32[]', space=smem, size = 0x4, offset = 0x4, fixed_abs, tag = 'smem constant byte address 0x4 - core index']
  #allocation1 [shape = 'u32[144,128]{1,0:T(1,128)}', space=vmem, size = 0x12000, scoped, tag = 'internal scratch']
  %s0 = inlined_call_operand.vmem [shape: f32[16,32], index: 0, kind: input, shape index: {}]
  %s1 = inlined_call_operand.vmem [shape: f32[32,64], index: 1, kind: input, shape index: {}]
  %s2 = inlined_call_operand.vmem [shape: f32[1,64], index: 2, kind: input, shape index: {}]
  %s3 = inlined_call_operand.vmem [shape: f32[64,8], index: 3, kind: input, shape index: {}]
  %s4 = inlined_call_operand.vmem [shape: f32[1,8], index: 4, kind: input, shape index: {}]
  %s5 = inlined_call_operand.vmem [shape: f32[16,8], index: 5, kind: output, shape index: {}]
  %s6 = sld [smem:[#allocation0]]
  $region30: #{_policy_forward_jit.1} parent=0
    _
  %s8 = ssub.s32 1, %s6
  %s9 = scalar_select 0, %s8, %s6
  // Predicated region
  $region2: #{_policy_forward_jit.1} parent=0 // pred_check
    _
  $region3: #{_policy_forward_jit.1} parent=0 // pred_check_branch
    %11 = sbr.rel (0) target = $region5
  $region4: #{_policy_forward_jit.1} parent=0 // pred_region
    _
  $region5: #{_policy_forward_jit.1} parent=0 // pred_fallthru
    _
  // Predicated region
  $region6: #{_policy_forward_jit.1} parent=0 // pred_check
    _
  $region7: #{_policy_forward_jit.1} parent=0 // pred_check_branch
    %13 = sbr.rel (0) target = $region9
  $region8: #{_policy_forward_jit.1} parent=0 // pred_region
    _
  $region9: #{_policy_forward_jit.1} parent=0 // pred_fallthru
    _
  // Predicated region
  $region10: #{_policy_forward_jit.1} parent=0 // pred_check
    _
  $region11: #{_policy_forward_jit.1} parent=0 // pred_check_branch
    %15 = sbr.rel (0) target = $region13
  $region12: #{_policy_forward_jit.1} parent=0 // pred_region
    _
  $region13: #{_policy_forward_jit.1} parent=0 // pred_fallthru
    _
  // Predicated region
  $region14: #{_policy_forward_jit.1} parent=0 // pred_check
    _
  $region15: #{_policy_forward_jit.1} parent=0 // pred_check_branch
    %17 = sbr.rel (0) target = $region17
  $region16: #{_policy_forward_jit.1} parent=0 // pred_region
    _
  $region17: #{_policy_forward_jit.1} parent=0 // pred_fallthru
    _
  // Predicated region
  $region18: #{_policy_forward_jit.1} parent=0 // pred_check
    _
  $region19: #{_policy_forward_jit.1} parent=0 // pred_check_branch
    %19 = sbr.rel (0) target = $region21
  $region20: #{_policy_forward_jit.1} parent=0 // pred_region
    _
  $region21: #{_policy_forward_jit.1} parent=0 // pred_fallthru
    _
  %v20 = vld [vmem:[%s0] sm:$0xff]
  %v21 = vld [vmem:[%s0 + $0x8] sm:$0xff]
  %v22 = vld [vmem:[%s1] sm:$0xff]
  %v23 = vld [vmem:[%s1 + $0x8] sm:$0xff]
  %v24 = vld [vmem:[%s1 + $0x10] sm:$0xff]
  %v25 = vld [vmem:[%s1 + $0x18] sm:$0xff]
  %v26 = vld [vmem:[%s2] sm:$0x1]
  %v28 = vlaneseq
  %v29 = vshrl.u32 %v28, 7
  %v30 = vsub.s32 0, %v29
  %v31 = vrot.slane %v26, %v30
  %vm33 = vcmask 261120
  %v35 = vsel %vm33, %v20, 0
  %v38 = vsel %vm33, %v21, 0
  %40 = vmatprep.subr.mxu0 0.0
  %41 = vmatpush1.msra.mxu0 %v22
  %42 = vmatprep.subr.mxu0 0.0
  %43 = vmatpush1.msra.mxu0 %v23
  %44 = vmatprep.subr.mxu0 0.0
  %45 = vmatpush1.msra.mxu0 %v24
  %46 = vmatprep.subr.mxu0 0.0
  %47 = vmatpush1.msra.mxu0 %v25
  %48 = vmatprep.subr.mxu0 0.0
  %49 = vmatpush1.msra.mxu0 0.0
  %50 = vmatprep.subr.mxu0 0.0
  %51 = vmatpush1.msra.mxu0 0.0
  %52 = vmatprep.subr.mxu0 0.0
  %53 = vmatpush1.msra.mxu0 0.0
  %54 = vmatprep.subr.mxu0 0.0
  %55 = vmatpush1.msra.mxu0 0.0
  %56 = vmatprep.subr.mxu0 0.0
  %57 = vmatpush1.msra.mxu0 0.0
  %58 = vmatprep.subr.mxu0 0.0
  %59 = vmatpush1.msra.mxu0 0.0
  %60 = vmatprep.subr.mxu0 0.0
  %61 = vmatpush1.msra.mxu0 0.0
  %62 = vmatprep.subr.mxu0 0.0
  %63 = vmatpush1.msra.mxu0 0.0
  %64 = vmatprep.subr.mxu0 0.0
  %65 = vmatpush1.msra.mxu0 0.0
  %66 = vmatprep.subr.mxu0 0.0
  %67 = vmatpush1.msra.mxu0 0.0
  %68 = vmatprep.subr.mxu0 0.0
  %69 = vmatpush1.msra.mxu0 0.0
  %70 = vmatprep.subr.mxu0 0.0
  %71 = vmatpush1.msra.mxu0 0.0
  %72 = vmatprep.subr.mxu0 0.0
  %73 = vmatpush1.msra.mxu0 0.0
  %74 = vmatprep.subr.mxu0 0.0
  %75 = vmatpush1.msra.mxu0 0.0
  %76 = vmatprep.subr.mxu0 0.0
  %77 = vmatpush1.msra.mxu0 0.0
  %78 = vmatprep.subr.mxu0 0.0
  %79 = vmatpush1.msra.mxu0 0.0
  %80 = vmatprep.subr.mxu0 0.0
  %81 = vmatpush1.msra.mxu0 0.0
  %82 = vmatprep.subr.mxu0 0.0
  %83 = vmatpush1.msra.mxu0 0.0
  %84 = vmatprep.subr.mxu0 0.0
  %85 = vmatpush1.msra.mxu0 0.0
  %86 = vmatprep.subr.mxu0 0.0
  %87 = vmatpush1.msra.mxu0 0.0
  %88 = vmatprep.subr.mxu0 0.0
  %89 = vmatpush1.msra.mxu0 0.0
  %90 = vmatprep.subr.mxu0 0.0
  %91 = vmatpush1.msra.mxu0 0.0
  %92 = vmatprep.subr.mxu0 0.0
  %93 = vmatpush1.msra.mxu0 0.0
  %94 = vmatprep.subr.mxu0 0.0
  %95 = vmatpush1.msra.mxu0 0.0
  %96 = vmatprep.subr.mxu0 0.0
  %97 = vmatpush1.msra.mxu0 0.0
  %98 = vmatprep.subr.mxu0 0.0
  %99 = vmatpush1.msra.mxu0 0.0
  %100 = vmatprep.subr.mxu0 0.0
  %101 = vmatpush1.msra.mxu0 0.0
  %102 = vmatprep.subr.mxu0 0.0
  %103 = vmatpush1.msra.mxu0 0.0
  %104 = vmatprep.mubr.f32.mxu0 0.0
  %105 = vmatmul.mubr.f32.gmra.mrb[0].mxu0 %v35
  %v106 = vpop.f32.mrb[0].mxu0
  %v107 = vadd.f32 %v31, %v106
  %v108 = vpop.f32.mrb[0].mxu0
  %109 = vmatprep.mubr.f32.mxu0 0.0
  %110 = vmatmul.mubr.f32.gmra.mrb[0].mxu0 %v38
  %v111 = vpop.f32.mrb[0].mxu0
  %v112 = vadd.f32 %v31, %v111
  %v113 = vpop.f32.mrb[0].mxu0
  %114 = vdwg.mxu0
  %v115 = vmax.f32 %v107, 0.0
  %v116 = vmax.f32 %v112, 0.0
  %v117 = vld [vmem:[%s3] sm:$0xff]
  %v118 = vld [vmem:[%s3 + $0x8] sm:$0xff]
  %v119 = vld [vmem:[%s3 + $0x10] sm:$0xff]
  %v120 = vld [vmem:[%s3 + $0x18] sm:$0xff]
  %v121 = vld [vmem:[%s3 + $0x20] sm:$0xff]
  %v122 = vld [vmem:[%s3 + $0x28] sm:$0xff]
  %v123 = vld [vmem:[%s3 + $0x30] sm:$0xff]
  %v124 = vld [vmem:[%s3 + $0x38] sm:$0xff]
  %v125 = vld [vmem:[%s4] sm:$0x1]
  %v127 = vlaneseq
  %v128 = vshrl.u32 %v127, 7
  %v129 = vsub.s32 0, %v128
  %v130 = vrot.slane %v125, %v129
  %vm132 = vcmask 523264
  %v134 = vsel %vm132, %v115, 0
  %v137 = vsel %vm132, %v116, 0
  %139 = vmatprep.subr.mxu0 0.0
  %140 = vmatpush1.msra.mxu0 %v117
  %141 = vmatprep.subr.mxu0 0.0
  %142 = vmatpush1.msra.mxu0 %v118
  %143 = vmatprep.subr.mxu0 0.0
  %144 = vmatpush1.msra.mxu0 %v119
  %145 = vmatprep.subr.mxu0 0.0
  %146 = vmatpush1.msra.mxu0 %v120
  %147 = vmatprep.subr.mxu0 0.0
  %148 = vmatpush1.msra.mxu0 %v121
  %149 = vmatprep.subr.mxu0 0.0
  %150 = vmatpush1.msra.mxu0 %v122
  %151 = vmatprep.subr.mxu0 0.0
  %152 = vmatpush1.msra.mxu0 %v123
  %153 = vmatprep.subr.mxu0 0.0
  %154 = vmatpush1.msra.mxu0 %v124
  %155 = vmatprep.subr.mxu0 0.0
  %156 = vmatpush1.msra.mxu0 0.0
  %157 = vmatprep.subr.mxu0 0.0
  %158 = vmatpush1.msra.mxu0 0.0
  %159 = vmatprep.subr.mxu0 0.0
  %160 = vmatpush1.msra.mxu0 0.0
  %161 = vmatprep.subr.mxu0 0.0
  %162 = vmatpush1.msra.mxu0 0.0
  %163 = vmatprep.subr.mxu0 0.0
  %164 = vmatpush1.msra.mxu0 0.0
  %165 = vmatprep.subr.mxu0 0.0
  %166 = vmatpush1.msra.mxu0 0.0
  %167 = vmatprep.subr.mxu0 0.0
  %168 = vmatpush1.msra.mxu0 0.0
  %169 = vmatprep.subr.mxu0 0.0
  %170 = vmatpush1.msra.mxu0 0.0
  %171 = vmatprep.subr.mxu0 0.0
  %172 = vmatpush1.msra.mxu0 0.0
  %173 = vmatprep.subr.mxu0 0.0
  %174 = vmatpush1.msra.mxu0 0.0
  %175 = vmatprep.subr.mxu0 0.0
  %176 = vmatpush1.msra.mxu0 0.0
  %177 = vmatprep.subr.mxu0 0.0
  %178 = vmatpush1.msra.mxu0 0.0
  %179 = vmatprep.subr.mxu0 0.0
  %180 = vmatpush1.msra.mxu0 0.0
  %181 = vmatprep.subr.mxu0 0.0
  %182 = vmatpush1.msra.mxu0 0.0
  %183 = vmatprep.subr.mxu0 0.0
  %184 = vmatpush1.msra.mxu0 0.0
  %185 = vmatprep.subr.mxu0 0.0
  %186 = vmatpush1.msra.mxu0 0.0
  %187 = vmatprep.subr.mxu0 0.0
  %188 = vmatpush1.msra.mxu0 0.0
  %189 = vmatprep.subr.mxu0 0.0
  %190 = vmatpush1.msra.mxu0 0.0
  %191 = vmatprep.subr.mxu0 0.0
  %192 = vmatpush1.msra.mxu0 0.0
  %193 = vmatprep.subr.mxu0 0.0
  %194 = vmatpush1.msra.mxu0 0.0
  %195 = vmatprep.subr.mxu0 0.0
  %196 = vmatpush1.msra.mxu0 0.0
  %197 = vmatprep.subr.mxu0 0.0
  %198 = vmatpush1.msra.mxu0 0.0
  %199 = vmatprep.subr.mxu0 0.0
  %200 = vmatpush1.msra.mxu0 0.0
  %201 = vmatprep.subr.mxu0 0.0
  %202 = vmatpush1.msra.mxu0 0.0
  %203 = vmatprep.mubr.f32.mxu0 0.0
  %204 = vmatmul.mubr.f32.gmra.mrb[0].mxu0 %v134
  %v205 = vpop.f32.mrb[0].mxu0
  %v206 = vadd.f32 %v130, %v205
  %v207 = vpop.f32.mrb[0].mxu0
  %208 = vmatprep.mubr.f32.mxu0 0.0
  %209 = vmatmul.mubr.f32.gmra.mrb[0].mxu0 %v137
  %v210 = vpop.f32.mrb[0].mxu0
  %v211 = vadd.f32 %v130, %v210
  %v212 = vpop.f32.mrb[0].mxu0
  %213 = vdwg.mxu0
  %vm214 = vcmask 64512
  %v215 = vsel %vm214, %v206, -inf
  %216 = vmax.xlane.f32.xlu0 %v215
  %v217 = vpop.xlane.xlu0 %216
  %v218 = vsel %vm214, %v211, -inf
  %219 = vmax.xlane.f32.xlu0 %v218
  %v220 = vpop.xlane.xlu0 %219
  %v221 = vsub.f32 %v206, %v217
  %v222 = vsub.f32 %v211, %v220
  %v223 = vmul.f32 %v221, 1.442695
  %v224 = vpow.pop %v223
  %v225 = vmul.f32 %v222, 1.442695
  %v226 = vpow.pop %v225
  %v227 = vsel %vm214, %v224, 0.0
  %228 = vadd.xlane.f32.xlu0 %v227
  %v229 = vpop.xlane.xlu0 %228
  %v230 = vsel %vm214, %v226, 0.0
  %231 = vadd.xlane.f32.xlu0 %v230
  %v232 = vpop.xlane.xlu0 %231
  %v233 = vrcp.pop %v229
  %v234 = vmul.f32 %v224, %v233
  %v235 = vrcp.pop %v232
  %v236 = vmul.f32 %v226, %v235
  %237 = vst.msk [vmem:[%s5] sm:$0xff] %vm214, %v234
  %238 = vst.msk [vmem:[%s5 + $0x8] sm:$0xff] %vm214, %v236
  // Predicated region
  $region22: #{_policy_forward_jit.1} parent=0 // pred_check
    _
  $region23: #{_policy_forward_jit.1} parent=0 // pred_check_branch
    %240 = sbr.rel (0) target = $region25
  $region24: #{_policy_forward_jit.1} parent=0 // pred_region
    _
  $region25: #{_policy_forward_jit.1} parent=0 // pred_fallthru
    _
  // Predicated region
  $region26: #{_policy_forward_jit.1} parent=0 // pred_check
    _
  $region27: #{_policy_forward_jit.1} parent=0 // pred_check_branch
    %242 = sbr.rel (0) target = $region29
  $region28: #{_policy_forward_jit.1} parent=0 // pred_region
    _
  $region29: #{_policy_forward_jit.1} parent=0 // pred_fallthru
    _

</llo_original>
